<compile_context>
chip_gen: v5e
topology: v5e:2x2
jax: 0.10.0
libtpu: 0.0.40
codegen_flags: <defaults>
</compile_context>

<pallas_src>
import functools

import jax
import jax.numpy as jnp
from jax.experimental import pallas as pl
from jax.experimental.pallas import tpu as pltpu


def _focal_loss_kernel(logits_ref, targets_ref, out_ref, *, alpha, gamma, n_rows):
    """Per-row focal loss for one (TN, C) block of logits.

    logits_ref : (TN, C) block in the input dtype.  The last grid step's block
                 may hang past the true N rows (unpadded input) -- those rows
                 are masked to zero below.
    targets_ref: (TN, 1) int32 block (rows past N hold padding; value unused).
    out_ref    : (TN, 1) float32 per-row focal loss.
    """
    x = logits_ref[...].astype(jnp.float32)            # (TN, C)
    tn, c = x.shape

    # Numerically stable log-softmax pieces along the lane (class) axis.
    m = jnp.max(x, axis=-1, keepdims=True)              # (TN, 1)
    lse = jnp.log(jnp.sum(jnp.exp(x - m), axis=-1, keepdims=True))

    # Gather the target-class logit from the *raw* cast logits so the
    # select + cross-lane reduce is independent of the max/exp/sum chain
    # (free ILP for the VLIW scheduler).  NOTE: out-of-range targets
    # (t < 0 or t >= C) silently give x_t = 0 and a finite-but-wrong loss
    # (PyTorch would raise); inputs are assumed valid.
    t = targets_ref[...]                                 # (TN, 1) int32
    cls = jax.lax.broadcasted_iota(jnp.int32, (tn, c), 1)
    x_t = jnp.sum(jnp.where(cls == t, x, 0.0), axis=-1, keepdims=True)
    log_pt = x_t - m - lse                               # (TN, 1)

    g = float(gamma)
    if g == 0.0:
        mod = jnp.ones_like(log_pt)
    elif g == 1.0:
        mod = jnp.maximum(1.0 - jnp.exp(log_pt), 0.0)
    elif g == 2.0:
        q = jnp.maximum(1.0 - jnp.exp(log_pt), 0.0)
        mod = q * q                                      # one VPU mul, no pow chain
    elif g.is_integer() and 0.0 < g <= 8.0:
        q = jnp.maximum(1.0 - jnp.exp(log_pt), 0.0)
        mod = q
        for _ in range(int(g) - 1):
            mod = mod * q
    else:
        # expm1 keeps (1 - pt) accurate near pt ~ 1 (matters for gamma < 1).
        q = jnp.maximum(-jnp.expm1(log_pt), 0.0)
        mod = q ** g

    focal = (-float(alpha)) * mod * log_pt               # (TN, 1)

    # Mask rows past the true batch size: the last grid step's block reads
    # past the end of the unpadded logits array (garbage, possibly NaN/Inf),
    # and those rows must contribute exactly zero.
    row = pl.program_id(0) * tn + jax.lax.broadcasted_iota(jnp.int32, (tn, 1), 0)
    out_ref[...] = jnp.where(row < n_rows, focal, 0.0)


def _round_up(x, m):
    return ((x + m - 1) // m) * m


def focal_loss(logits, targets, alpha=1.0, gamma=2.0, reduction="mean"):
    """Pallas-TPU implementation of FocalLoss.forward for 2-D logits (N, C)."""
    n, c = logits.shape
    itemsize = jnp.dtype(logits.dtype).itemsize

    # Sublane tile for the input dtype (f32: 8, bf16: 16, int8/fp8: 32).
    sub = {4: 8, 2: 16, 1: 32}.get(itemsize, 8)

    # VMEM bytes per block row, counting the f32 *working set*:
    #   - double-buffered input block (lanes pad to 128 in VMEM; no HBM pad),
    #   - ~4 full-size 32-bit intermediates (x.astype(f32), exp(x-m),
    #     where-select result, class iota),
    #   - (TN, 1) target/output columns, lane-padded to 128 (512 B/row each,
    #     two buffers each).
    c_lanes = _round_up(c, 128)
    per_row_vmem = c_lanes * (2 * itemsize + 4 * 4) + 4 * 512

    budget = 28 * 1024 * 1024                 # ~28 MiB working-set target
    tn = max(sub, (budget // per_row_vmem) // sub * sub)
    # Keep >= ~4 grid steps so the "parallel" row axis can split across both
    # v7x TensorCores and the pipeline has something to overlap.
    tn = min(tn, max(sub, _round_up(-(-n // 4), sub)))

    grid_n = -(-n // tn)                      # cdiv
    n_pad = grid_n * tn

    # Only the tiny int32 targets vector is padded; the big logits tensor is
    # streamed unpadded straight from HBM.
    t2 = targets.reshape(n).astype(jnp.int32)
    if n_pad > n:
        t2 = jnp.pad(t2, (0, n_pad - n))
    t2 = t2.reshape(n_pad, 1)

    kernel = functools.partial(
        _focal_loss_kernel, alpha=float(alpha), gamma=float(gamma), n_rows=n)

    per_row = pl.pallas_call(
        kernel,
        out_shape=jax.ShapeDtypeStruct((n_pad, 1), jnp.float32),
        grid_spec=pltpu.PrefetchScalarGridSpec(
            num_scalar_prefetch=0,
            grid=(grid_n,),
            in_specs=[
                # Full-C last dim: exempt from the 128-lane divisibility rule.
                pl.BlockSpec((tn, c), lambda i: (i, 0)),
                pl.BlockSpec((tn, 1), lambda i: (i, 0)),
            ],
            out_specs=pl.BlockSpec((tn, 1), lambda i: (i, 0)),
        ),
        compiler_params=pltpu.CompilerParams(
            dimension_semantics=("parallel",),        # independent row tiles
            vmem_limit_bytes=48 * 1024 * 1024,        # safe on v7x's 64 MiB VMEM
        ),
        cost_estimate=pl.CostEstimate(
            flops=6 * n * c,
            transcendentals=n * c + 2 * n,
            bytes_accessed=n * c * itemsize + n * 4 + n_pad * 4,
        ),
    )(logits, t2)

    if reduction == "mean":
        return jnp.sum(per_row) / jnp.float32(n)      # padded rows contribute 0
    elif reduction == "sum":
        return jnp.sum(per_row)
    else:  # 'none' -> per-sample vector
        return per_row[:n, 0]


def _focal_loss_ref(logits, targets, alpha=1.0, gamma=2.0):
    """Pure-JAX reference matching the PyTorch module (per-sample values)."""
    log_prob = jax.nn.log_softmax(logits.astype(jnp.float32), axis=-1)
    prob = jnp.exp(log_prob)
    idx = targets[:, None]
    pt = jnp.take_along_axis(prob, idx, axis=-1)[:, 0]
    log_pt = jnp.take_along_axis(log_prob, idx, axis=-1)[:, 0]
    return -alpha * (1.0 - pt) ** gamma * log_pt


if __name__ == "__main__":
    key = jax.random.PRNGKey(0)
    k1, k2 = jax.random.split(key)

    # Small batch, 32 classes; N=10 (not a multiple of 8) exercises the
    # ragged last row-block + in-kernel row mask, and C=32 exercises the
    # unpadded full-extent class axis.
    N, C = 10, 32
    logits = jax.random.normal(k1, (N, C), dtype=jnp.float32)
    targets = jax.random.randint(k2, (N,), 0, C, dtype=jnp.int32)

    fl_ref = _focal_loss_ref(logits, targets)

    loss_mean = jax.block_until_ready(focal_loss(logits, targets, reduction="mean"))
    loss_sum = jax.block_until_ready(focal_loss(logits, targets, reduction="sum"))
    loss_none = jax.block_until_ready(focal_loss(logits, targets, reduction="none"))

    assert jnp.allclose(loss_mean, fl_ref.mean(), rtol=1e-5, atol=1e-5), (
        loss_mean, fl_ref.mean())
    assert jnp.allclose(loss_sum, fl_ref.sum(), rtol=1e-5, atol=1e-5), (
        loss_sum, fl_ref.sum())
    assert jnp.allclose(loss_none, fl_ref, rtol=1e-5, atol=1e-5)

    print("KERNEL_OK")
</pallas_src>

<mosaic_0001>
module attributes {stable_mosaic.version = 11 : i64} {
  func.func @_focal_loss_kernel(%arg0: i32, %arg1: memref<8x32xf32, #tpu.memory_space<vmem>>, %arg2: memref<8x1xi32, #tpu.memory_space<vmem>>, %arg3: memref<8x1xf32, #tpu.memory_space<vmem>>) attributes {dimension_semantics = [#tpu.dimension_semantics<parallel>], iteration_bounds = array<i64: 2>, scalar_prefetch = 0 : i64, scratch_operands = 0 : i64, tpu.core_type = #tpu.core_type<tc>, window_params = [{transform_indices = @transform_0, window_bounds = array<i64: 8, 32>}, {transform_indices = @transform_1, window_bounds = array<i64: 8, 1>}, {transform_indices = @transform_2, window_bounds = array<i64: 8, 1>}]} {
    %c0 = arith.constant 0 : index
    %c0_0 = arith.constant 0 : index
    %0 = vector.load %arg1[%c0, %c0_0] : memref<8x32xf32, #tpu.memory_space<vmem>>, vector<8x32xf32>
    %cst = arith.constant dense<0xFF800000> : vector<8xf32>
    %1 = vector.multi_reduction <maximumf>, %0, %cst [1] : vector<8x32xf32> to vector<8xf32>
    %2 = vector.shape_cast %1 : vector<8xf32> to vector<8x1xf32>
    %3 = vector.broadcast %2 : vector<8x1xf32> to vector<8x32xf32>
    %4 = arith.subf %0, %3 : vector<8x32xf32>
    %5 = math.exp %4 : vector<8x32xf32>
    %cst_1 = arith.constant dense<0.000000e+00> : vector<8xf32>
    %6 = vector.multi_reduction <add>, %5, %cst_1 [1] : vector<8x32xf32> to vector<8xf32>
    %7 = vector.shape_cast %6 : vector<8xf32> to vector<8x1xf32>
    %8 = math.log %7 : vector<8x1xf32>
    %c0_2 = arith.constant 0 : index
    %c0_3 = arith.constant 0 : index
    %9 = vector.load %arg2[%c0_2, %c0_3] : memref<8x1xi32, #tpu.memory_space<vmem>>, vector<8x1xi32>
    %10 = tpu.iota {dimensions = array<i32: 1>} : vector<8x32xi32>
    %11 = vector.broadcast %9 : vector<8x1xi32> to vector<8x32xi32>
    %12 = arith.cmpi eq, %10, %11 : vector<8x32xi32>
    %cst_4 = arith.constant 0.000000e+00 : f32
    %13 = vector.broadcast %cst_4 : f32 to vector<8x32xf32>
    %14 = arith.select %12, %0, %13 : vector<8x32xi1>, vector<8x32xf32>
    %cst_5 = arith.constant dense<0.000000e+00> : vector<8xf32>
    %15 = vector.multi_reduction <add>, %14, %cst_5 [1] : vector<8x32xf32> to vector<8xf32>
    %16 = vector.shape_cast %15 : vector<8xf32> to vector<8x1xf32>
    %17 = arith.subf %16, %2 : vector<8x1xf32>
    %18 = arith.subf %17, %8 : vector<8x1xf32>
    %19 = math.exp %18 : vector<8x1xf32>
    %cst_6 = arith.constant 1.000000e+00 : f32
    %20 = vector.broadcast %cst_6 : f32 to vector<8x1xf32>
    %21 = arith.subf %20, %19 : vector<8x1xf32>
    %cst_7 = arith.constant 0.000000e+00 : f32
    %22 = vector.broadcast %cst_7 : f32 to vector<8x1xf32>
    %23 = arith.maximumf %21, %22 : vector<8x1xf32>
    %24 = arith.mulf %23, %23 : vector<8x1xf32>
    %cst_8 = arith.constant -1.000000e+00 : f32
    %25 = vector.broadcast %cst_8 : f32 to vector<8x1xf32>
    %26 = arith.mulf %25, %24 : vector<8x1xf32>
    %27 = arith.mulf %26, %18 : vector<8x1xf32>
    %c8_i32 = arith.constant 8 : i32
    %28 = arith.muli %arg0, %c8_i32 : i32
    %29 = tpu.iota {dimensions = array<i32: 0>} : vector<8x1xi32>
    %30 = vector.broadcast %28 : i32 to vector<8x1xi32>
    %31 = arith.addi %30, %29 : vector<8x1xi32>
    %c10_i32 = arith.constant 10 : i32
    %32 = vector.broadcast %c10_i32 : i32 to vector<8x1xi32>
    %33 = arith.cmpi slt, %31, %32 : vector<8x1xi32>
    %cst_9 = arith.constant 0.000000e+00 : f32
    %34 = vector.broadcast %cst_9 : f32 to vector<8x1xf32>
    %35 = arith.select %33, %27, %34 : vector<8x1xi1>, vector<8x1xf32>
    %c0_10 = arith.constant 0 : index
    %c0_11 = arith.constant 0 : index
    %36 = vector.load %arg3[%c0_10, %c0_11] : memref<8x1xf32, #tpu.memory_space<vmem>>, vector<8x1xf32>
    tpu.vector_store %arg3[%c0_10, %c0_11], %35 {strides = array<i32>} : memref<8x1xf32, #tpu.memory_space<vmem>>, vector<8x1xf32>,
    return
  }
  func.func @transform_0(%arg0: i32) -> (i32, i32) {
    %c0_i32 = arith.constant 0 : i32
    %c0_i32_0 = arith.constant 0 : i32
    return %arg0, %c0_i32 : i32, i32
  }
  func.func @transform_1(%arg0: i32) -> (i32, i32) {
    %c0_i32 = arith.constant 0 : i32
    %c0_i32_0 = arith.constant 0 : i32
    return %arg0, %c0_i32 : i32, i32
  }
  func.func @transform_2(%arg0: i32) -> (i32, i32) {
    %c0_i32 = arith.constant 0 : i32
    %c0_i32_0 = arith.constant 0 : i32
    return %arg0, %c0_i32 : i32, i32
  }
}

</mosaic_0001>

<llo_original>
// kernel: tpu_custom_call.1
$region0: #{tpu_custom_call.1}
  #allocation0 [shape = 'u32[]', space=smem, size = 0x4, offset = 0x4, fixed_abs, tag = 'smem constant byte address 0x4 - core index']
  #allocation1 [shape = 'u32[72,128]{1,0:T(1,128)}', space=vmem, size = 0x9000, scoped, tag = 'internal scratch']
  %s0 = inlined_call_operand.vmem [shape: f32[10,32], index: 0, kind: input, shape index: {}]
  %s1 = inlined_call_operand.vmem [shape: s32[16,1], index: 1, kind: input, shape index: {}]
  %s2 = inlined_call_operand.vmem [shape: f32[16,1], index: 2, kind: output, shape index: {}]
  %s3 = sld [smem:[#allocation0]]
  $region41: #{tpu_custom_call.1} parent=0
    _
  %s5 = ssub.s32 1, %s3
  %s6 = scalar_select 0, %s5, %s3
  loop: start=0, step=1, limit=4
  $region2: #{tpu_custom_call.1} parent=0 // loop_pre_header
    _
  $region3: #{tpu_custom_call.1} parent=0 // loop_header
    %s8 = sphi 0, %s12
    %p9 = scmp.ge.s32.totalorder %s8, 4
    %s18 = sphi 0, %s20
    %s21 = sphi 0, %s18
    %s22 = sphi 0, %s21
    %s38 = sphi 0, %s22
    %s44 = sphi 0, %s46
    %s47 = sphi 0, %s44
    %s48 = sphi 0, %s47
    %s64 = sphi 0, %s48
    %s70 = sphi 0, %s72
    %s73 = sphi 0, %s70
    %s74 = sphi 0, %s73
    %s90 = sphi 0, %s74
  $region4: #{tpu_custom_call.1} parent=0 // loop_header_branch
    %11 = sbr.rel (%p9) target = $region8
  $region5: #{tpu_custom_call.1} parent=0 // loop_body
    %s13 = ssub.s32 %s8, 1
    %s14 = ssub.s32 %s8, 2
    %s15 = sadd.s32 %s8, 1
    %s16 = ssub.s32 %s8, %s15
    %p17 = scmp.eq.s32.totalorder %s16, 0
    %s19 = sadd.s32 %s18, 1
    %s20 = scalar_select %p17, %s18, %s19
    %p23 = pneg %p17
    %p24 = scmp.eq.s32.totalorder %s8, 1
    %p25 = por %p23, %p24
    %p26 = scmp.ne.s32.totalorder %s18, %s21
    %p27 = scmp.eq.s32.totalorder %s8, 0
    %p28 = por %p26, %p27
    %p29 = scmp.ne.s32.totalorder %s18, %s21
    %p30 = scmp.eq.s32.totalorder %s13, 1
    %p31 = por %p29, %p30
    %p32 = scmp.ne.s32.totalorder %s21, %s22
    %p33 = scmp.eq.s32.totalorder %s13, 0
    %p34 = por %p32, %p33
    %p35 = scmp.ne.s32.totalorder %s21, %s22
    %p36 = scmp.eq.s32.totalorder %s14, 1
    %p37 = por %p35, %p36
    %p39 = scmp.ne.s32.totalorder %s22, %s38
    %p40 = scmp.eq.s32.totalorder %s14, 0
    %p41 = por %p39, %p40
    %s42 = ssub.s32 %s8, %s15
    %p43 = scmp.eq.s32.totalorder %s42, 0
    %s45 = sadd.s32 %s44, 1
    %s46 = scalar_select %p43, %s44, %s45
    %p49 = pneg %p43
    %p50 = scmp.eq.s32.totalorder %s8, 1
    %p51 = por %p49, %p50
    %p52 = scmp.ne.s32.totalorder %s44, %s47
    %p53 = scmp.eq.s32.totalorder %s8, 0
    %p54 = por %p52, %p53
    %p55 = scmp.ne.s32.totalorder %s44, %s47
    %p56 = scmp.eq.s32.totalorder %s13, 1
    %p57 = por %p55, %p56
    %p58 = scmp.ne.s32.totalorder %s47, %s48
    %p59 = scmp.eq.s32.totalorder %s13, 0
    %p60 = por %p58, %p59
    %p61 = scmp.ne.s32.totalorder %s47, %s48
    %p62 = scmp.eq.s32.totalorder %s14, 1
    %p63 = por %p61, %p62
    %p65 = scmp.ne.s32.totalorder %s48, %s64
    %p66 = scmp.eq.s32.totalorder %s14, 0
    %p67 = por %p65, %p66
    %s68 = ssub.s32 %s8, %s15
    %p69 = scmp.eq.s32.totalorder %s68, 0
    %s71 = sadd.s32 %s70, 1
    %s72 = scalar_select %p69, %s70, %s71
    %p75 = pneg %p69
    %p76 = scmp.eq.s32.totalorder %s8, 1
    %p77 = por %p75, %p76
    %p78 = scmp.ne.s32.totalorder %s70, %s73
    %p79 = scmp.eq.s32.totalorder %s8, 0
    %p80 = por %p78, %p79
    %p81 = scmp.ne.s32.totalorder %s70, %s73
    %p82 = scmp.eq.s32.totalorder %s13, 1
    %p83 = por %p81, %p82
    %p84 = scmp.ne.s32.totalorder %s73, %s74
    %p85 = scmp.eq.s32.totalorder %s13, 0
    %p86 = por %p84, %p85
    %p87 = scmp.ne.s32.totalorder %s73, %s74
    %p88 = scmp.eq.s32.totalorder %s14, 1
    %p89 = por %p87, %p88
    %p91 = scmp.ne.s32.totalorder %s74, %s90
    %p92 = scmp.eq.s32.totalorder %s14, 0
    %p93 = por %p91, %p92
    %p94 = scmp.le.s32.totalorder 1, %s8
    %p95 = scmp.lt.s32.totalorder %s8, 3
    %p96 = pnand %p94, %p95
    %p97 = pneg %p96
    // Predicated region
    $region9: #{tpu_custom_call.1} parent=5 // pred_check
      _
    $region10: #{tpu_custom_call.1} parent=5 // pred_check_branch
      %99 = sbr.rel (%p96) target = $region12
    $region11: #{tpu_custom_call.1} parent=5 // pred_region
      %s100 = ssub.s32 %s8, 1
    $region12: #{tpu_custom_call.1} parent=5 // pred_fallthru
      _
    %p101 = scmp.lt.s32.totalorder %s8, 2
    // Predicated region
    $region13: #{tpu_custom_call.1} parent=5 // pred_check
      %p102 = pneg %p101
    $region14: #{tpu_custom_call.1} parent=5 // pred_check_branch
      %104 = sbr.rel (%p102) target = $region16
    $region15: #{tpu_custom_call.1} parent=5 // pred_region
      // Predicated region
      $region17: #{tpu_custom_call.1} parent=15 // pred_check
        %p105 = pneg %p28
      $region18: #{tpu_custom_call.1} parent=15 // pred_check_branch
        %107 = sbr.rel (%p105) target = $region20
      $region19: #{tpu_custom_call.1} parent=15 // pred_region
        %p108 = scmp.lt.s32.totalorder %s8, 1
        %s109 = scalar_select %p108, %s8, 1
        %s110 = smul.addr %s109, 8
        %s111 = scalar_lea.vmem %s0, %s110
      $region20: #{tpu_custom_call.1} parent=15 // pred_fallthru
        _
      // Predicated region
      $region21: #{tpu_custom_call.1} parent=15 // pred_check
        %p112 = pneg %p54
      $region22: #{tpu_custom_call.1} parent=15 // pred_check_branch
        %114 = sbr.rel (%p112) target = $region24
      $region23: #{tpu_custom_call.1} parent=15 // pred_region
        %p115 = scmp.lt.s32.totalorder %s8, 1
        %s116 = scalar_select %p115, %s8, 1
        %s117 = smul.addr %s116, 8
        %s118 = scalar_lea.vmem %s1, %s117
      $region24: #{tpu_custom_call.1} parent=15 // pred_fallthru
        _
    $region16: #{tpu_custom_call.1} parent=5 // pred_fallthru
      _
    %p119 = scmp.le.s32.totalorder 1, %s8
    %p120 = scmp.lt.s32.totalorder %s8, 3
    %p121 = pnand %p119, %p120
    %p122 = pneg %p121
    // Predicated region
    $region25: #{tpu_custom_call.1} parent=5 // pred_check
      _
    $region26: #{tpu_custom_call.1} parent=5 // pred_check_branch
      %124 = sbr.rel (%p121) target = $region28
    $region27: #{tpu_custom_call.1} parent=5 // pred_region
      %s125 = ssub.s32 %s8, 1
      %p126 = scmp.lt.s32.totalorder %s13, 1
      %s127 = scalar_select %p126, %s13, 1
      %s128 = smul.addr %s127, 8
      %s129 = scalar_lea.vmem %s0, %s128
      %p130 = pneg %p34
      %p131 = pneg %p31
      %p132 = scmp.lt.s32.totalorder %s13, 1
      %s133 = scalar_select %p132, %s13, 1
      %s134 = smul.addr %s133, 8
      %s135 = scalar_lea.vmem %s1, %s134
      %p136 = pneg %p60
      %p137 = pneg %p57
      %p138 = pneg %p86
      %p139 = pneg %p83
      %p140 = scmp.lt.s32.totalorder %s13, 1
      %s141 = scalar_select %p140, %s13, 1
      %s142 = smul.addr %s141, 8
      %s143 = scalar_lea.vmem %s2, %s142
      %p144 = scmp.lt.s32.totalorder %s13, 1
      %s145 = scalar_select %p144, %s13, 1
      %s146 = smul.addr %s145, 8
      %s147 = scalar_lea.vmem %s0, %s146
      %p148 = scmp.lt.s32.totalorder %s13, 1
      %s149 = scalar_select %p148, %s13, 1
      %s150 = smul.addr %s149, 8
      %s151 = scalar_lea.vmem %s1, %s150
      %p152 = scmp.lt.s32.totalorder %s13, 1
      %s153 = scalar_select %p152, %s13, 1
      %s154 = smul.addr %s153, 8
      %s155 = scalar_lea.vmem %s2, %s154
      %v156 = vld [vmem:[%s147] sm:$0xff]
      %vm157 = vcmask 261120
      %v158 = vsel %vm157, %v156, -inf
      %159 = vmax.xlane.f32.xlu0 %v158
      %v160 = vpop.xlane.xlu0 %159
      %v161 = vsub.f32 %v156, %v160
      %v162 = vmul.f32 %v161, 1.442695
      %v163 = vpow.pop %v162
      %v164 = vsel %vm157, %v163, 0.0
      %165 = vadd.xlane.f32.xlu0 %v164
      %v166 = vpop.xlane.xlu0 %165
      %v167 = vlog2.pop %v166
      %v168 = vmul.f32 %v167, 0.6931472
      %v169 = vld [vmem:[%s151] sm:$0xff]
      %v170 = vlaneseq
      %v171 = vand.u32 %v170, 127
      %172 = vset.pattern.permute.xlu0 0
      %173 = vperm.xlu0 %172, %v169
      %v174 = vpop.permute.xlu0 %173
      %vm175 = vcmp.eq.s32.totalorder %v171, %v174
      %v176 = vsel %vm175, %v156, 0.0
      %v177 = vsel %vm157, %v176, 0.0
      %178 = vadd.xlane.f32.xlu0 %v177
      %v179 = vpop.xlane.xlu0 %178
      %v180 = vsub.f32 %v179, %v160
      %v181 = vsub.f32 %v180, %v168
      %v182 = vmul.f32 %v181, 1.442695
      %v183 = vpow.pop %v182
      %v184 = vsub.f32 1.0, %v183
      %v185 = vmax.f32 %v184, 0.0
      %v186 = vmul.f32 %v185, %v185
      %v187 = vmul.f32 %v186, -1.0
      %v188 = vmul.f32 %v187, %v181
      %s189 = smul.u32 %s13, 8
      %v190 = vlaneseq
      %v191 = vshrl.u32 %v190, 7
      %v192 = vstv %s189
      %v193 = vadd.s32 %v192, %v191
      %vm194 = vcmp.lt.s32.totalorder %v193, 10
      %v195 = vsel %vm194, %v188, 0.0
      %vm196 = vcmask 7168
      %197 = vst.msk [vmem:[%s155] sm:$0xff] %vm196, %v195
      %p198 = scmp.lt.s32.totalorder %s13, 1
      %s199 = scalar_select %p198, %s13, 1
      %s200 = smul.addr %s199, 8
      %s201 = scalar_lea.vmem %s2, %s200
      // Predicated region
      $region29: #{tpu_custom_call.1} parent=27 // pred_check
        %p202 = pneg %p83
      $region30: #{tpu_custom_call.1} parent=27 // pred_check_branch
        %204 = sbr.rel (%p202) target = $region32
      $region31: #{tpu_custom_call.1} parent=27 // pred_region
        _
      $region32: #{tpu_custom_call.1} parent=27 // pred_fallthru
        _
    $region28: #{tpu_custom_call.1} parent=5 // pred_fallthru
      _
    %p205 = scmp.le.s32.totalorder 2, %s8
    // Predicated region
    $region33: #{tpu_custom_call.1} parent=5 // pred_check
      %p206 = pneg %p205
    $region34: #{tpu_custom_call.1} parent=5 // pred_check_branch
      %208 = sbr.rel (%p206) target = $region36
    $region35: #{tpu_custom_call.1} parent=5 // pred_region
      %s209 = ssub.s32 %s8, 2
      // Predicated region
      $region37: #{tpu_custom_call.1} parent=35 // pred_check
        %p210 = pneg %p89
      $region38: #{tpu_custom_call.1} parent=35 // pred_check_branch
        %212 = sbr.rel (%p210) target = $region40
      $region39: #{tpu_custom_call.1} parent=35 // pred_region
        %p213 = scmp.lt.s32.totalorder %s14, 1
        %s214 = scalar_select %p213, %s14, 1
        %s215 = smul.addr %s214, 8
        %s216 = scalar_lea.vmem %s2, %s215
      $region40: #{tpu_custom_call.1} parent=35 // pred_fallthru
        _
    $region36: #{tpu_custom_call.1} parent=5 // pred_fallthru
      _
  $region6: #{tpu_custom_call.1} parent=0 // loop_footer
    %s12 = sadd.s32 1, %s8
  $region7: #{tpu_custom_call.1} parent=0 // loop_footer_branch
    %7 = sbr.rel target = $region3
  $region8: #{tpu_custom_call.1} parent=0 // loop_exit
    _

</llo_original>
